<compile_context>
chip_gen: v7x
topology: tpu7x:2x2x1
jax: 0.10.0
libtpu: 0.0.40
codegen_flags: <defaults>
</compile_context>

<pallas_src>
import functools

import jax
import jax.numpy as jnp
import numpy as np
from jax.experimental import pallas as pl
from jax.experimental.pallas import tpu as pltpu


def _round_up(x, m):
    return ((x + m - 1) // m) * m


def _rope_table_kernel(inv_freq_ref, group_ref, cos_ref, sin_ref, *, pack):
    # inv_freq_ref: (1, W) f32 — inv_freq tiled `pack` times along lanes.
    # group_ref:    (1, W) i32 — lane -> within-packed-row position offset.
    # cos_ref/sin_ref: (TILE_R, W) output tiles, W = pack * half (lane-dense).
    tile_rows = cos_ref.shape[0]
    base = pl.program_id(0) * tile_rows                     # packed-row offset of this tile
    row = jax.lax.broadcasted_iota(jnp.int32, cos_ref.shape, 0)
    # Exact integer positions, single cast for the angle math.
    pos = ((base + row) * pack + group_ref[...]).astype(jnp.float32)
    freqs = pos * inv_freq_ref[...]                          # VPU (outer product via broadcast)
    cos_ref[...] = jnp.cos(freqs).astype(cos_ref.dtype)      # EUP
    sin_ref[...] = jnp.sin(freqs).astype(sin_ref.dtype)      # EUP


def _build_rope_tables(max_seq_len, dim, *, table_dtype=jnp.float32, tile_rows_max=512):
    half = (dim + 1) // 2                      # == len(torch.arange(0, dim, 2))

    # Lane packing: `pack` consecutive positions per vreg row.
    pack = max(1, 128 // half) if half < 128 else 1
    width = pack * half                        # kernel lane width
    # TODO(synk): if half is not a divisor/multiple of 128 (e.g. dim=48), width < 128
    # and stores are partially masked; correctness is unaffected.

    s_rows = pl.cdiv(max_seq_len, pack)        # packed sequence rows
    tile_rows = min(tile_rows_max, _round_up(s_rows, 8))
    if s_rows > 8:
        # Keep >= 2 grid steps so the "parallel" axis shards across the two
        # TensorCores on v7x (harmless on 1-TC chips).
        tile_rows = min(tile_rows, max(8, _round_up(pl.cdiv(s_rows, 2), 8)))
    s_rows_pad = _round_up(s_rows, tile_rows)
    grid = (s_rows_pad // tile_rows,)

    inv_freq = 1.0 / (10000.0 ** (jnp.arange(0, dim, 2, dtype=jnp.float32) / dim))
    inv_freq_tiled = jnp.tile(inv_freq, pack).reshape(1, width)
    group = jnp.repeat(jnp.arange(pack, dtype=jnp.int32), half).reshape(1, width)

    itemsize = jnp.dtype(table_dtype).itemsize
    cost = pl.CostEstimate(
        flops=3 * s_rows_pad * width,
        transcendentals=2 * s_rows_pad * width,
        bytes_accessed=2 * s_rows_pad * width * itemsize + 2 * width * 4,
    )

    kernel = functools.partial(_rope_table_kernel, pack=pack)
    cos_pk, sin_pk = pl.pallas_call(
        kernel,
        out_shape=(
            jax.ShapeDtypeStruct((s_rows_pad, width), table_dtype),
            jax.ShapeDtypeStruct((s_rows_pad, width), table_dtype),
        ),
        grid_spec=pl.GridSpec(
            grid=grid,
            in_specs=[
                # Block index constant across the grid -> each fetched once.
                pl.BlockSpec((1, width), lambda i: (0, 0)),
                pl.BlockSpec((1, width), lambda i: (0, 0)),
            ],
            out_specs=[
                pl.BlockSpec((tile_rows, width), lambda i: (i, 0)),
                pl.BlockSpec((tile_rows, width), lambda i: (i, 0)),
            ],
        ),
        compiler_params=pltpu.CompilerParams(
            dimension_semantics=("parallel",),
        ),
        cost_estimate=cost,
    )(inv_freq_tiled, group)

    # Un-pack: contiguous row-major reshape (free) + trailing-row drop.
    cos = cos_pk.reshape(s_rows_pad * pack, half)[:max_seq_len]
    sin = sin_pk.reshape(s_rows_pad * pack, half)[:max_seq_len]
    return cos, sin


class RotaryEmbedding:
    """JAX/Pallas port of the PyTorch RotaryEmbedding module (forward only)."""

    def __init__(self, dim, max_seq_len=1000, table_dtype=jnp.float32):
        self.dim = dim
        self.max_seq_len = max_seq_len
        cos, sin = _build_rope_tables(max_seq_len, dim, table_dtype=table_dtype)
        self.cos = jax.block_until_ready(cos)           # (S, H), torch-buffer equivalent
        self.sin = jax.block_until_ready(sin)
        # Cache both unsqueezed layouts once so __call__ never reshapes.
        self._cos_b = self.cos[None, :, :]              # (1, S, H) for seq_dim == 1
        self._sin_b = self.sin[None, :, :]
        self._cos_s = self.cos[:, None, :]              # (S, 1, H) otherwise
        self._sin_s = self.sin[:, None, :]

    def __call__(self, x, seq_dim=1):
        seq_len = x.shape[seq_dim]
        if seq_dim == 1:
            cos, sin = self._cos_b, self._sin_b
            if seq_len != self.max_seq_len:
                cos = jax.lax.slice_in_dim(cos, 0, seq_len, axis=1)
                sin = jax.lax.slice_in_dim(sin, 0, seq_len, axis=1)
        else:
            cos, sin = self._cos_s, self._sin_s
            if seq_len != self.max_seq_len:
                cos = jax.lax.slice_in_dim(cos, 0, seq_len, axis=0)
                sin = jax.lax.slice_in_dim(sin, 0, seq_len, axis=0)
        return cos, sin

    # TODO(synk): apply_rotary_pos_emb is not part of forward() and its
    # broadcasting in the reference (cos.unsqueeze(2) vs 3-D x) is ill-formed,
    # so it is intentionally not ported here.


if __name__ == "__main__":
    dim = 32              # -> half = 16, lane pack = 8
    max_seq_len = 64
    batch, seq = 2, 8

    key = jax.random.PRNGKey(0)
    x = jax.random.normal(key, (batch, seq, dim), dtype=jnp.float32)

    rope = RotaryEmbedding(dim, max_seq_len=max_seq_len)
    cos, sin = rope(x, seq_dim=1)
    cos, sin = jax.block_until_ready(cos), jax.block_until_ready(sin)

    # Pure-numpy reference of the torch semantics.
    inv_freq_np = 1.0 / (10000.0 ** (np.arange(0, dim, 2, dtype=np.float32) / dim))
    pos_np = np.arange(0, max_seq_len, dtype=np.float32)
    freqs_np = np.outer(pos_np, inv_freq_np)
    cos_ref = np.cos(freqs_np)[:seq, :][None, :, :]
    sin_ref = np.sin(freqs_np)[:seq, :][None, :, :]

    assert cos.shape == (1, seq, dim // 2) and sin.shape == (1, seq, dim // 2)
    np.testing.assert_allclose(np.asarray(cos), cos_ref, rtol=1e-5, atol=1e-5)
    np.testing.assert_allclose(np.asarray(sin), sin_ref, rtol=1e-5, atol=1e-5)

    # A different seq_len reuses the cached table (no new kernel launch).
    cos2, sin2 = rope(x[:, :4, :], seq_dim=1)
    np.testing.assert_allclose(np.asarray(cos2)[0], np.cos(freqs_np)[:4, :], rtol=1e-5, atol=1e-5)

    # seq_dim != 1 path: (S, 1, H) layout.
    cos3, _ = rope(x[:, :seq, :].transpose(1, 0, 2), seq_dim=0)
    assert cos3.shape == (seq, 1, dim // 2)
    np.testing.assert_allclose(np.asarray(cos3)[:, 0, :], np.cos(freqs_np)[:seq, :], rtol=1e-5, atol=1e-5)

    # Larger table exercising pack>1 with grid>1 + row padding (max_seq_len
    # not a multiple of pack*tile_rows). Loose tolerance: angles up to ~1000
    # rad make f32 range-reduction differences O(1e-4); a row-placement bug
    # would show up as O(1) errors.
    rope_big = RotaryEmbedding(dim, max_seq_len=1000)
    pos_big = np.arange(0, 1000, dtype=np.float64)
    freqs_big = np.outer(pos_big, inv_freq_np.astype(np.float64))
    np.testing.assert_allclose(np.asarray(rope_big.cos), np.cos(freqs_big), rtol=0, atol=2e-3)
    np.testing.assert_allclose(np.asarray(rope_big.sin), np.sin(freqs_big), rtol=0, atol=2e-3)

    print("KERNEL_OK")
</pallas_src>

<mosaic_0001>
module attributes {stable_mosaic.version = 11 : i64} {
  func.func @_rope_table_kernel(%arg0: i32, %arg1: memref<1x128xf32, #tpu.memory_space<vmem>>, %arg2: memref<1x128xi32, #tpu.memory_space<vmem>>, %arg3: memref<8x128xf32, #tpu.memory_space<vmem>>, %arg4: memref<8x128xf32, #tpu.memory_space<vmem>>) attributes {dimension_semantics = [#tpu.dimension_semantics<parallel>], iteration_bounds = array<i64: 1>, scalar_prefetch = 0 : i64, scratch_operands = 0 : i64, tpu.core_type = #tpu.core_type<tc>, window_params = [{pipeline_mode = #tpu.pipeline_mode<synchronous>, transform_indices = @transform_0, window_bounds = array<i64: 1, 128>}, {pipeline_mode = #tpu.pipeline_mode<synchronous>, transform_indices = @transform_1, window_bounds = array<i64: 1, 128>}, {transform_indices = @transform_2, window_bounds = array<i64: 8, 128>}, {transform_indices = @transform_3, window_bounds = array<i64: 8, 128>}]} {
    %c8_i32 = arith.constant 8 : i32
    %0 = arith.muli %arg0, %c8_i32 : i32
    %1 = tpu.iota {dimensions = array<i32: 0>} : vector<8x128xi32>
    %2 = vector.broadcast %0 : i32 to vector<8x128xi32>
    %3 = arith.addi %2, %1 : vector<8x128xi32>
    %c8_i32_0 = arith.constant 8 : i32
    %4 = vector.broadcast %c8_i32_0 : i32 to vector<8x128xi32>
    %5 = arith.muli %3, %4 : vector<8x128xi32>
    %c0 = arith.constant 0 : index
    %c0_1 = arith.constant 0 : index
    %6 = vector.load %arg2[%c0, %c0_1] : memref<1x128xi32, #tpu.memory_space<vmem>>, vector<1x128xi32>
    %7 = vector.broadcast %6 : vector<1x128xi32> to vector<8x128xi32>
    %8 = arith.addi %5, %7 : vector<8x128xi32>
    %9 = arith.sitofp %8 : vector<8x128xi32> to vector<8x128xf32>
    %c0_2 = arith.constant 0 : index
    %c0_3 = arith.constant 0 : index
    %10 = vector.load %arg1[%c0_2, %c0_3] : memref<1x128xf32, #tpu.memory_space<vmem>>, vector<1x128xf32>
    %11 = vector.broadcast %10 : vector<1x128xf32> to vector<8x128xf32>
    %12 = arith.mulf %9, %11 : vector<8x128xf32>
    %13 = math.cos %12 : vector<8x128xf32>
    %c0_4 = arith.constant 0 : index
    %c0_5 = arith.constant 0 : index
    %14 = vector.load %arg3[%c0_4, %c0_5] : memref<8x128xf32, #tpu.memory_space<vmem>>, vector<8x128xf32>
    tpu.vector_store %arg3[%c0_4, %c0_5], %13 {strides = array<i32>} : memref<8x128xf32, #tpu.memory_space<vmem>>, vector<8x128xf32>,
    %15 = math.sin %12 : vector<8x128xf32>
    %c0_6 = arith.constant 0 : index
    %c0_7 = arith.constant 0 : index
    %16 = vector.load %arg4[%c0_6, %c0_7] : memref<8x128xf32, #tpu.memory_space<vmem>>, vector<8x128xf32>
    tpu.vector_store %arg4[%c0_6, %c0_7], %15 {strides = array<i32>} : memref<8x128xf32, #tpu.memory_space<vmem>>, vector<8x128xf32>,
    return
  }
  func.func @transform_0(%arg0: i32) -> (i32, i32) {
    %c0_i32 = arith.constant 0 : i32
    %c0_i32_0 = arith.constant 0 : i32
    %c0_i32_1 = arith.constant 0 : i32
    return %c0_i32, %c0_i32_0 : i32, i32
  }
  func.func @transform_1(%arg0: i32) -> (i32, i32) {
    %c0_i32 = arith.constant 0 : i32
    %c0_i32_0 = arith.constant 0 : i32
    %c0_i32_1 = arith.constant 0 : i32
    return %c0_i32, %c0_i32_0 : i32, i32
  }
  func.func @transform_2(%arg0: i32) -> (i32, i32) {
    %c0_i32 = arith.constant 0 : i32
    %c0_i32_0 = arith.constant 0 : i32
    return %arg0, %c0_i32 : i32, i32
  }
  func.func @transform_3(%arg0: i32) -> (i32, i32) {
    %c0_i32 = arith.constant 0 : i32
    %c0_i32_0 = arith.constant 0 : i32
    return %arg0, %c0_i32 : i32, i32
  }
}

</mosaic_0001>

<llo_original>
// kernel: tpu_custom_call.1
$region0: #{tpu_custom_call.1}
  #allocation0 [shape = 'u32[]', space=smem, size = 0x4, offset = 0x4, fixed_abs, tag = 'smem constant byte address 0x4 - core index']
  #allocation1 [shape = 'u32[144,128]{1,0:T(1,128)}', space=vmem, size = 0x12000, scoped, tag = 'internal scratch']
  %s0 = inlined_call_operand.hbm [shape: f32[1,128], index: 0, kind: input, shape index: {}]
  %s1 = inlined_call_operand.vmem [shape: s32[1,128], index: 1, kind: input, shape index: {}]
  %s2 = inlined_call_operand.hbm [shape: f32[8,128], index: 2, kind: output, shape index: {0}]
  %s3 = inlined_call_operand.hbm [shape: f32[8,128], index: 3, kind: output, shape index: {1}]
  %4 = xla_tuple %s2, %s3
  %s5 = sld [smem:[#allocation0]]
  $region30: #{tpu_custom_call.1} parent=0
    _
  %s7 = ssub.s32 1, %s5
  %s8 = scalar_select 0, %s7, %s5
  $region1: #{tpu_custom_call.1} parent=0
    #allocation2 [shape = 'u8[512]{0}', space=vmem, size = 0x400, scoped, tag = 'input window, operand 0, single buffered']
    #allocation3 [shape = 's32[1]{0}', space=sflag, size = 0x4, scoped, tag = 'scoped memory for tpu_custom_call.1']
    #allocation4 [shape = 's32[1]{0}', space=sflag, size = 0x4, scoped, tag = 'scoped memory for tpu_custom_call.1']
    #allocation5 [shape = 'u8[4096]{0}', space=vmem, size = 0x1000, scoped, tag = 'output window, operand 0, single buffered']
    #allocation6 [shape = 'u8[4096]{0}', space=vmem, size = 0x1000, scoped, tag = 'output window, operand 1, single buffered']
    #allocation7 [shape = 's32[1]{0}', space=sflag, size = 0x4, scoped, tag = 'scoped memory for tpu_custom_call.1']
    %9 = vsyncpa [#allocation3], 0
    %10 = vsyncpa [#allocation4], 0
    %11 = vsyncpa [#allocation7], 0
    // Predicated region
    $region2: #{tpu_custom_call.1} parent=1 // pred_check
      _
    $region3: #{tpu_custom_call.1} parent=1 // pred_check_branch
      %13 = sbr.rel (0) target = $region5
    $region4: #{tpu_custom_call.1} parent=1 // pred_region
      %s15 = ssub.s32 16, 16
      %16 = vsyncadd [#allocation3], %s15
      %s18 = sshll.u32 [#allocation2], 4
      %s19 = int_to_ptr.vmem [resolvable:$true] %s18
      %21 = dma.hbm_to_vmem [thread:$0]  %s0, 16, %s19, [#allocation3]
    $region5: #{tpu_custom_call.1} parent=1 // pred_fallthru
      _
    // Predicated region
    $region6: #{tpu_custom_call.1} parent=1 // pred_check
      _
    $region7: #{tpu_custom_call.1} parent=1 // pred_check_branch
      %23 = sbr.rel (0) target = $region9
    $region8: #{tpu_custom_call.1} parent=1 // pred_region
      _
    $region9: #{tpu_custom_call.1} parent=1 // pred_fallthru
      _
    // Predicated region
    $region10: #{tpu_custom_call.1} parent=1 // pred_check
      _
    $region11: #{tpu_custom_call.1} parent=1 // pred_check_branch
      %25 = sbr.rel (0) target = $region13
    $region12: #{tpu_custom_call.1} parent=1 // pred_region
      %26 = dma.done [#allocation3], 16
    $region13: #{tpu_custom_call.1} parent=1 // pred_fallthru
      _
    %s27 = smul.u32 0, 8
    %v28 = vlaneseq
    %v29 = vshrl.u32 %v28, 7
    %v30 = vstv %s27
    %v31 = vadd.s32 %v30, %v29
    %v32 = vmul.u32 %v31, 8
    %v33 = vld [vmem:[%s1] sm:$0x1]
    %v34 = vlaneseq
    %v35 = vshrl.u32 %v34, 7
    %v36 = vsub.s32 0, %v35
    %v37 = vrot.slane %v33, %v36
    %v38 = vadd.s32 %v32, %v37
    %v39 = vcvt.s32.f32 %v38
    %v40 = vld [vmem:[#allocation2] sm:$0x1]
    %v42 = vlaneseq
    %v43 = vshrl.u32 %v42, 7
    %v44 = vsub.s32 0, %v43
    %v45 = vrot.slane %v40, %v44
    %v47 = vmul.f32 %v39, %v45
    %v48 = vand.u32 2147483647, %v47
    %vm49 = vcmp.le.f32.partialorder %v48, 0.7853982
    %vm50 = vcmp.lt.s32.totalorder %v47, 0
    %v51 = vand.u32 %v47, 2139095040
    %v52 = vshrl.u32 %v51, 23
    %v53 = vsub.s32 %v52, 127
    %v54 = vand.u32 2147483647, %v47
    %v55 = vand.u32 %v54, 8388607
    %v56 = vor.u32 %v55, 8388608
    %v57 = vsub.s32 0, %v56
    %v58 = vadd.s32 %v53, 1
    %vm59 = vcmp.gt.s32.totalorder %v58, 0
    %v60 = vsel %vm59, %v58, 0
    %v61 = vshrl.u32 %v60, 5
    %v62 = vand.u32 %v60, 31
    %v63 = vsub.s32 32, %v62
    %v64 = vshrl.u32 683565275, %v63
    %v65 = vshll.u32 683565275, %v62
    %v66 = vshrl.u32 2475754826, %v63
    %v67 = vor.u32 %v65, %v66
    %v68 = vshll.u32 2475754826, %v62
    %v69 = vshrl.u32 2131351028, %v63
    %v70 = vor.u32 %v68, %v69
    %v71 = vshll.u32 2131351028, %v62
    %v72 = vshrl.u32 2102212464, %v63
    %v73 = vor.u32 %v71, %v72
    %v74 = vshll.u32 2102212464, %v62
    %v75 = vshrl.u32 920167782, %v63
    %v76 = vor.u32 %v74, %v75
    %v77 = vshll.u32 920167782, %v62
    %v78 = vshrl.u32 1326507024, %v63
    %v79 = vor.u32 %v77, %v78
    %vm80 = vcmp.lt.s32.totalorder %v61, 1
    %vm81 = vcmp.lt.s32.totalorder %v61, 2
    %vm82 = vcmp.lt.s32.totalorder %v61, 3
    %vm83 = vcmp.lt.s32.totalorder %v61, 4
    %v84 = vsel %vm80, %v64, %v67
    %v85 = vsel %vm83, %v73, 2102212464
    %v86 = vsel %vm82, %v70, %v85
    %v87 = vsel %vm81, %v84, %v86
    %v88 = vsel %vm80, %v67, %v70
    %v89 = vsel %vm83, %v76, 920167782
    %v90 = vsel %vm82, %v73, %v89
    %v91 = vsel %vm81, %v88, %v90
    %v92 = vsel %vm80, %v70, %v73
    %v93 = vsel %vm83, %v79, 1326507024
    %v94 = vsel %vm82, %v76, %v93
    %v95 = vsel %vm81, %v92, %v94
    %v96 = vshll.u32 %v56, 8
    %v97 = vmul.u32.u64.compose %v96, %v95
    %v98 = vextract.low.u32 %v97
    %v99 = vextract.high.u32 %v97
    %v100 = vmul.u32.u64.compose %v96, %v91
    %v101 = vextract.low.u32 %v100
    %v102 = vextract.high.u32 %v100
    %v103 = vmul.u32 %v96, %v87
    %v104 = vadd.s32 %v99, %v101
    %vm105 = vc.u32 %v99, %v101
    %v106 = vadd.s32 %v102, 1
    %v107 = vsel %vm105, %v106, %v102
    %v108 = vadd.s32 %v103, %v107
    %v109 = vadd.s32 %v108, 536870912
    %v110 = vshrl.u32 %v109, 30
    %v111 = vshll.u32 %v110, 30
    %v112 = vsub.s32 %v108, %v111
    %vm113 = vcmp.lt.s32.totalorder %v112, 0
    %v114 = vsub.s32 0, %v112
    %v115 = vsel %vm113, %v114, %v112
    %v116 = vclz %v115
    %v117 = vsub.s32 %v116, 2
    %vm118 = vcmp.gt.s32.totalorder 0, %v117
    %v119 = vsel %vm118, 0, %v117
    %v120 = vsub.s32 32, %v119
    %v121 = vshll.u32 %v112, %v119
    %v122 = vshrl.u32 %v104, %v120
    %v123 = vor.u32 %v121, %v122
    %v124 = vsub.s32 4294967266, %v119
    %v125 = vadd.s32 %v124, 127
    %v126 = vshll.u32 %v125, 23
    %v127 = vor.u32 4788187, %v126
    %v128 = vand.u32 2147483647, %v127
    %v130 = vcvt.s32.f32 %v123
    %v131 = vmul.f32 %v130, %v128
    %v132 = vxor.u32 %v131, 2147483648
    %v133 = vsel %vm50, %v132, %v131
    %v134 = vsub.s32 4, %v110
    %v135 = vsel %vm50, %v134, %v110
    %v136 = vsel %vm49, %v47, %v133
    %v137 = vsel %vm49, 0, %v135
    %v138 = vcosq.f32.pop %v136
    %v139 = vsinq.f32.pop %v136
    %vm140 = vweird.f32 %v47
    %v141 = vand.u32 %v137, 3
    %vm142 = vcmp.lt.s32.totalorder %v141, 2
    %vm143 = vcmp.eq.s32.totalorder %v141, 0
    %v144 = vxor.u32 %v139, 2147483648
    %v145 = vsel %vm143, %v138, %v144
    %vm146 = vcmp.eq.s32.totalorder %v141, 2
    %v147 = vxor.u32 %v138, 2147483648
    %v148 = vsel %vm146, %v147, %v139
    %v149 = vsel %vm142, %v145, %v148
    %v150 = vsel %vm140, nan, %v149
    %151 = vst [vmem:[#allocation5] sm:$0xff] %v150
    %v152 = vand.u32 2147483647, %v47
    %vm153 = vcmp.le.f32.partialorder %v152, 0.7853982
    %vm154 = vcmp.lt.s32.totalorder %v47, 0
    %v155 = vand.u32 %v47, 2139095040
    %v156 = vshrl.u32 %v155, 23
    %v157 = vsub.s32 %v156, 127
    %v158 = vand.u32 2147483647, %v47
    %v159 = vand.u32 %v158, 8388607
    %v160 = vor.u32 %v159, 8388608
    %v161 = vsub.s32 0, %v160
    %v162 = vadd.s32 %v157, 1
    %vm163 = vcmp.gt.s32.totalorder %v162, 0
    %v164 = vsel %vm163, %v162, 0
    %v165 = vshrl.u32 %v164, 5
    %v166 = vand.u32 %v164, 31
    %v167 = vsub.s32 32, %v166
    %v168 = vshrl.u32 683565275, %v167
    %v169 = vshll.u32 683565275, %v166
    %v170 = vshrl.u32 2475754826, %v167
    %v171 = vor.u32 %v169, %v170
    %v172 = vshll.u32 2475754826, %v166
    %v173 = vshrl.u32 2131351028, %v167
    %v174 = vor.u32 %v172, %v173
    %v175 = vshll.u32 2131351028, %v166
    %v176 = vshrl.u32 2102212464, %v167
    %v177 = vor.u32 %v175, %v176
    %v178 = vshll.u32 2102212464, %v166
    %v179 = vshrl.u32 920167782, %v167
    %v180 = vor.u32 %v178, %v179
    %v181 = vshll.u32 920167782, %v166
    %v182 = vshrl.u32 1326507024, %v167
    %v183 = vor.u32 %v181, %v182
    %vm184 = vcmp.lt.s32.totalorder %v165, 1
    %vm185 = vcmp.lt.s32.totalorder %v165, 2
    %vm186 = vcmp.lt.s32.totalorder %v165, 3
    %vm187 = vcmp.lt.s32.totalorder %v165, 4
    %v188 = vsel %vm184, %v168, %v171
    %v189 = vsel %vm187, %v177, 2102212464
    %v190 = vsel %vm186, %v174, %v189
    %v191 = vsel %vm185, %v188, %v190
    %v192 = vsel %vm184, %v171, %v174
    %v193 = vsel %vm187, %v180, 920167782
    %v194 = vsel %vm186, %v177, %v193
    %v195 = vsel %vm185, %v192, %v194
    %v196 = vsel %vm184, %v174, %v177
    %v197 = vsel %vm187, %v183, 1326507024
    %v198 = vsel %vm186, %v180, %v197
    %v199 = vsel %vm185, %v196, %v198
    %v200 = vshll.u32 %v160, 8
    %v201 = vmul.u32.u64.compose %v200, %v199
    %v202 = vextract.low.u32 %v201
    %v203 = vextract.high.u32 %v201
    %v204 = vmul.u32.u64.compose %v200, %v195
    %v205 = vextract.low.u32 %v204
    %v206 = vextract.high.u32 %v204
    %v207 = vmul.u32 %v200, %v191
    %v208 = vadd.s32 %v203, %v205
    %vm209 = vc.u32 %v203, %v205
    %v210 = vadd.s32 %v206, 1
    %v211 = vsel %vm209, %v210, %v206
    %v212 = vadd.s32 %v207, %v211
    %v213 = vadd.s32 %v212, 536870912
    %v214 = vshrl.u32 %v213, 30
    %v215 = vshll.u32 %v214, 30
    %v216 = vsub.s32 %v212, %v215
    %vm217 = vcmp.lt.s32.totalorder %v216, 0
    %v218 = vsub.s32 0, %v216
    %v219 = vsel %vm217, %v218, %v216
    %v220 = vclz %v219
    %v221 = vsub.s32 %v220, 2
    %vm222 = vcmp.gt.s32.totalorder 0, %v221
    %v223 = vsel %vm222, 0, %v221
    %v224 = vsub.s32 32, %v223
    %v225 = vshll.u32 %v216, %v223
    %v226 = vshrl.u32 %v208, %v224
    %v227 = vor.u32 %v225, %v226
    %v228 = vsub.s32 4294967266, %v223
    %v229 = vadd.s32 %v228, 127
    %v230 = vshll.u32 %v229, 23
    %v231 = vor.u32 4788187, %v230
    %v232 = vand.u32 2147483647, %v231
    %v234 = vcvt.s32.f32 %v227
    %v235 = vmul.f32 %v234, %v232
    %v236 = vxor.u32 %v235, 2147483648
    %v237 = vsel %vm154, %v236, %v235
    %v238 = vsub.s32 4, %v214
    %v239 = vsel %vm154, %v238, %v214
    %v240 = vsel %vm153, %v47, %v237
    %v241 = vsel %vm153, 0, %v239
    %v242 = vcosq.f32.pop %v240
    %v243 = vsinq.f32.pop %v240
    %vm244 = vweird.f32 %v47
    %v245 = vadd.s32 %v241, 3
    %v246 = vand.u32 %v245, 3
    %vm247 = vcmp.lt.s32.totalorder %v246, 2
    %vm248 = vcmp.eq.s32.totalorder %v246, 0
    %v249 = vxor.u32 %v243, 2147483648
    %v250 = vsel %vm248, %v242, %v249
    %vm251 = vcmp.eq.s32.totalorder %v246, 2
    %v252 = vxor.u32 %v242, 2147483648
    %v253 = vsel %vm251, %v252, %v243
    %v254 = vsel %vm247, %v250, %v253
    %v255 = vsel %vm244, nan, %v254
    %256 = vst [vmem:[#allocation6] sm:$0xff] %v255
    // Predicated region
    $region14: #{tpu_custom_call.1} parent=1 // pred_check
      _
    $region15: #{tpu_custom_call.1} parent=1 // pred_check_branch
      %258 = sbr.rel (0) target = $region17
    $region16: #{tpu_custom_call.1} parent=1 // pred_region
      %s260 = ssub.s32 128, 128
      %261 = vsyncadd [#allocation4], %s260
      %s263 = sshll.u32 [#allocation5], 4
      %s264 = int_to_ptr.vmem [resolvable:$true] %s263
      %266 = dma.vmem_to_hbm [thread:$0]  %s264, 128, %s2, [#allocation4]
    $region17: #{tpu_custom_call.1} parent=1 // pred_fallthru
      _
    // Predicated region
    $region18: #{tpu_custom_call.1} parent=1 // pred_check
      _
    $region19: #{tpu_custom_call.1} parent=1 // pred_check_branch
      %268 = sbr.rel (0) target = $region21
    $region20: #{tpu_custom_call.1} parent=1 // pred_region
      %s270 = ssub.s32 128, 128
      %271 = vsyncadd [#allocation7], %s270
      %s273 = sshll.u32 [#allocation6], 4
      %s274 = int_to_ptr.vmem [resolvable:$true] %s273
      %276 = dma.vmem_to_hbm [thread:$0]  %s274, 128, %s3, [#allocation7]
    $region21: #{tpu_custom_call.1} parent=1 // pred_fallthru
      _
    // Predicated region
    $region22: #{tpu_custom_call.1} parent=1 // pred_check
      _
    $region23: #{tpu_custom_call.1} parent=1 // pred_check_branch
      %278 = sbr.rel (0) target = $region25
    $region24: #{tpu_custom_call.1} parent=1 // pred_region
      %279 = dma.done [#allocation4], 128
    $region25: #{tpu_custom_call.1} parent=1 // pred_fallthru
      _
    // Predicated region
    $region26: #{tpu_custom_call.1} parent=1 // pred_check
      _
    $region27: #{tpu_custom_call.1} parent=1 // pred_check_branch
      %281 = sbr.rel (0) target = $region29
    $region28: #{tpu_custom_call.1} parent=1 // pred_region
      %282 = dma.done [#allocation7], 128
    $region29: #{tpu_custom_call.1} parent=1 // pred_fallthru
      _
    %283 = vsyncpa [#allocation3], 1
    %284 = vsyncpa [#allocation4], 1
    %285 = vsyncpa [#allocation7], 1

</llo_original>
